<compile_context>
chip_gen: v5e
topology: v5e:2x2
jax: 0.10.0
libtpu: 0.0.40
codegen_flags: <defaults>
</compile_context>

<pallas_src>
import math
import functools

import jax
import jax.numpy as jnp
from jax import lax
from jax.experimental import pallas as pl
from jax.experimental.pallas import tpu as pltpu


# ----------------------------------------------------------------------------
# Parameter setup (equivalent of __init__): sinusoidal positional table.
# ----------------------------------------------------------------------------
def make_positional_table(d_model: int, max_len: int = 5000) -> jnp.ndarray:
    """Returns pe of shape (max_len, d_model), float32 (pre-broadcast form)."""
    position = jnp.arange(0, max_len, dtype=jnp.float32)[:, None]            # (L, 1)
    div_term = jnp.exp(
        jnp.arange(0, d_model, 2, dtype=jnp.float32) * (-math.log(10000.0) / d_model)
    )                                                                          # (ceil(D/2),)
    angles = position * div_term                                               # (L, ceil(D/2))
    pe = jnp.zeros((max_len, d_model), dtype=jnp.float32)
    pe = pe.at[:, 0::2].set(jnp.sin(angles))
    if d_model % 2 == 0:
        pe = pe.at[:, 1::2].set(jnp.cos(angles))
    else:
        pe = pe.at[:, 1::2].set(jnp.cos(angles)[:, : d_model // 2])
    return pe  # (max_len, d_model)


# ----------------------------------------------------------------------------
# Pallas kernels
# ----------------------------------------------------------------------------
def _pe_add_kernel(x_ref, pe_ref, o_ref):
    # x_ref: (TS, B, D), pe_ref: (TS, D) -> broadcast add over the batch axis.
    o_ref[...] = (x_ref[...] + pe_ref[...][:, None, :]).astype(o_ref.dtype)


# murmur3 finalizer constants, expressed as wrapped int32 (two's complement).
_MUL1 = -2048144789   # 0x85EBCA6B
_MUL2 = -1028477379   # 0xC2B2AE35
_GOLD = -1640531527   # 0x9E3779B9


def _pe_add_dropout_kernel(seed_ref, x_ref, pe_ref, o_ref, *, p):
    # Inverted dropout (training): keep with prob (1-p), scale kept by 1/(1-p).
    ts, B, D = x_ref.shape
    y = x_ref[...] + pe_ref[...][:, None, :]

    # Absolute element index: the row uses the global sequence position, so
    # every grid tile gets a distinct, reproducible dropout mask.
    i = pl.program_id(0)
    shape = (ts, B, D)
    row = lax.broadcasted_iota(jnp.int32, shape, 0) + i * ts
    bb = lax.broadcasted_iota(jnp.int32, shape, 1)
    dd = lax.broadcasted_iota(jnp.int32, shape, 2)
    idx = (row * B + bb) * D + dd

    # Stateless murmur3-style finalizer.  All int32 with wrapping multiplies;
    # logical right-shifts emulated via arithmetic shift + mask so no unsigned
    # ops are needed (lowers cleanly under Mosaic and interpret mode).
    h = idx ^ (seed_ref[0] * jnp.int32(_GOLD))
    h = h ^ ((h >> 16) & jnp.int32(0xFFFF))
    h = h * jnp.int32(_MUL1)
    h = h ^ ((h >> 13) & jnp.int32(0x7FFFF))
    h = h * jnp.int32(_MUL2)
    h = h ^ ((h >> 16) & jnp.int32(0xFFFF))

    # h is ~uniform over all 32-bit patterns; keep iff h >= t gives P = 1 - p.
    t = int(round(p * 4294967296.0)) - 2147483648
    t = max(-2147483648, min(t, 2147483647))
    keep = h >= jnp.int32(t)

    scale = jnp.float32(1.0 / (1.0 - p))
    o_ref[...] = jnp.where(keep, y * scale, jnp.zeros_like(y)).astype(o_ref.dtype)


# ----------------------------------------------------------------------------
# Wrapper
# ----------------------------------------------------------------------------
def _choose_block_rows(S, B, D, itemsize, target_bytes=2 * 1024 * 1024):
    """Largest multiple-of-8 row tile whose x-block is ~target_bytes."""
    rows = target_bytes // max(1, B * D * itemsize)
    rows = max(8, (rows // 8) * 8)
    rows = min(rows, (S // 8) * 8)
    return int(max(8, rows))


def positional_encoding(x, pe_table, *, p=0.2, training=False, seed=0,
                        block_rows=None):
    """x: (S, B, D).  pe_table: (max_len, D) float32.  Returns (S, B, D)."""
    S, B, D = x.shape
    max_len = pe_table.shape[0]
    assert S <= max_len, "sequence longer than positional table"
    assert 0.0 <= p < 1.0, "dropout p must be in [0, 1)"

    itemsize = jnp.dtype(x.dtype).itemsize

    if S < 8:
        # Tiny-sequence fallback: single full block (pe sliced so block==array).
        ts = S
        pe_in = pe_table[:S]
    else:
        ts = _choose_block_rows(S, B, D, itemsize)
        if block_rows is not None:
            assert block_rows % 8 == 0 and block_rows > 0
            ts = min(block_rows, (S // 8) * 8)
        pe_in = pe_table            # rows selected by the BlockSpec index_map

    grid = (pl.cdiv(S, ts),)
    x_spec = pl.BlockSpec((ts, B, D), lambda i, *_: (i, 0, 0))
    pe_spec = pl.BlockSpec((ts, D), lambda i, *_: (i, 0))
    o_spec = pl.BlockSpec((ts, B, D), lambda i, *_: (i, 0, 0))
    out_shape = jax.ShapeDtypeStruct((S, B, D), x.dtype)
    cparams = pltpu.CompilerParams(dimension_semantics=("parallel",))

    if (not training) or p == 0.0:
        return pl.pallas_call(
            _pe_add_kernel,
            out_shape=out_shape,
            grid=grid,
            in_specs=[x_spec, pe_spec],
            out_specs=o_spec,
            compiler_params=cparams,
        )(x, pe_in)

    # Training: seed lands in SMEM via scalar prefetch; dropout mask is hashed
    # per tile from absolute element indices inside the pipelined block.
    seed_arr = jnp.asarray([seed], dtype=jnp.int32)
    kernel = functools.partial(_pe_add_dropout_kernel, p=p)
    return pl.pallas_call(
        kernel,
        out_shape=out_shape,
        grid_spec=pltpu.PrefetchScalarGridSpec(
            num_scalar_prefetch=1,
            grid=grid,
            in_specs=[x_spec, pe_spec],
            out_specs=o_spec,
        ),
        compiler_params=cparams,
    )(seed_arr, x, pe_in)


# ----------------------------------------------------------------------------
# Demo / self-test
# ----------------------------------------------------------------------------
if __name__ == "__main__":
    S, B, D = 48, 8, 128        # seq=48, batch=8, d_model=128 (lane/sublane dense)
    MAX_LEN = 512

    key = jax.random.PRNGKey(0)
    x = jax.random.normal(key, (S, B, D), dtype=jnp.float32)
    pe_table = make_positional_table(D, MAX_LEN)

    # ---- Eval path (dropout = identity), multi-block grid -------------------
    out = positional_encoding(x, pe_table, p=0.2, training=False, block_rows=16)
    out = jax.block_until_ready(out)
    ref = x + pe_table[:S][:, None, :]
    assert jnp.allclose(out, ref, atol=1e-6), "eval path mismatch vs reference"

    # ---- Eval path with a ragged sequence length (partial last block) -------
    S2 = 20
    x2 = x[:S2]
    out2 = jax.block_until_ready(
        positional_encoding(x2, pe_table, training=False, block_rows=16))
    ref2 = x2 + pe_table[:S2][:, None, :]
    assert jnp.allclose(out2, ref2, atol=1e-6), "ragged eval mismatch"

    # ---- Training path: in-kernel inverted dropout ---------------------------
    p = 0.2
    out_t = jax.block_until_ready(
        positional_encoding(x, pe_table, p=p, training=True, seed=1234,
                            block_rows=16))
    assert out_t.shape == (S, B, D)
    scaled = ref * jnp.float32(1.0 / (1.0 - p))
    is_zero = out_t == 0.0
    matches = jnp.abs(out_t - scaled) <= 1e-5 * (1.0 + jnp.abs(scaled))
    assert bool(jnp.all(is_zero | matches)), "dropout values not {0, y/(1-p)}"
    drop_frac = float(jnp.mean(is_zero.astype(jnp.float32)))
    assert 0.05 < drop_frac < 0.40, f"dropout fraction off: {drop_frac}"

    print("KERNEL_OK")
</pallas_src>

<mosaic_0001>
module attributes {stable_mosaic.version = 11 : i64} {
  func.func @_pe_add_kernel(%arg0: i32, %arg1: memref<16x8x128xf32, #tpu.memory_space<vmem>>, %arg2: memref<16x128xf32, #tpu.memory_space<vmem>>, %arg3: memref<16x8x128xf32, #tpu.memory_space<vmem>>) attributes {dimension_semantics = [#tpu.dimension_semantics<parallel>], iteration_bounds = array<i64: 3>, scalar_prefetch = 0 : i64, scratch_operands = 0 : i64, tpu.core_type = #tpu.core_type<tc>, window_params = [{transform_indices = @transform_0, window_bounds = array<i64: 16, 8, 128>}, {transform_indices = @transform_1, window_bounds = array<i64: 16, 128>}, {transform_indices = @transform_2, window_bounds = array<i64: 16, 8, 128>}]} {
    %c0 = arith.constant 0 : index
    %c0_0 = arith.constant 0 : index
    %c0_1 = arith.constant 0 : index
    %0 = vector.load %arg1[%c0, %c0_0, %c0_1] : memref<16x8x128xf32, #tpu.memory_space<vmem>>, vector<16x8x128xf32>
    %c0_2 = arith.constant 0 : index
    %c0_3 = arith.constant 0 : index
    %1 = vector.load %arg2[%c0_2, %c0_3] : memref<16x128xf32, #tpu.memory_space<vmem>>, vector<16x128xf32>
    %2 = vector.shape_cast %1 : vector<16x128xf32> to vector<16x1x128xf32>
    %3 = vector.broadcast %2 : vector<16x1x128xf32> to vector<16x8x128xf32>
    %4 = arith.addf %0, %3 : vector<16x8x128xf32>
    %c0_4 = arith.constant 0 : index
    %c0_5 = arith.constant 0 : index
    %c0_6 = arith.constant 0 : index
    %5 = vector.load %arg3[%c0_4, %c0_5, %c0_6] : memref<16x8x128xf32, #tpu.memory_space<vmem>>, vector<16x8x128xf32>
    tpu.vector_store %arg3[%c0_4, %c0_5, %c0_6], %4 {strides = array<i32>} : memref<16x8x128xf32, #tpu.memory_space<vmem>>, vector<16x8x128xf32>,
    return
  }
  func.func @transform_0(%arg0: i32) -> (i32, i32, i32) {
    %c0_i32 = arith.constant 0 : i32
    %c0_i32_0 = arith.constant 0 : i32
    %c0_i32_1 = arith.constant 0 : i32
    return %arg0, %c0_i32, %c0_i32_0 : i32, i32, i32
  }
  func.func @transform_1(%arg0: i32) -> (i32, i32) {
    %c0_i32 = arith.constant 0 : i32
    %c0_i32_0 = arith.constant 0 : i32
    return %arg0, %c0_i32 : i32, i32
  }
  func.func @transform_2(%arg0: i32) -> (i32, i32, i32) {
    %c0_i32 = arith.constant 0 : i32
    %c0_i32_0 = arith.constant 0 : i32
    %c0_i32_1 = arith.constant 0 : i32
    return %arg0, %c0_i32, %c0_i32_0 : i32, i32, i32
  }
}

</mosaic_0001>

<llo_original>
// kernel: tpu_custom_call.1
$region0: #{tpu_custom_call.1}
  #allocation0 [shape = 'u32[]', space=smem, size = 0x4, offset = 0x4, fixed_abs, tag = 'smem constant byte address 0x4 - core index']
  #allocation1 [shape = 'u32[72,128]{1,0:T(1,128)}', space=vmem, size = 0x9000, scoped, tag = 'internal scratch']
  %s0 = inlined_call_operand.hbm [shape: f32[48,8,128], index: 0, kind: input, shape index: {}]
  %s1 = inlined_call_operand.hbm [shape: f32[512,128], index: 1, kind: input, shape index: {}]
  %s2 = inlined_call_operand.hbm [shape: f32[48,8,128], index: 2, kind: output, shape index: {}]
  %s3 = sld [smem:[#allocation0]]
  $region49: #{tpu_custom_call.1} parent=0
    _
  %s5 = ssub.s32 1, %s3
  %s6 = scalar_select 0, %s5, %s3
  $region1: #{tpu_custom_call.1} parent=0
    #allocation2 [shape = 'u8[131072]{0}', space=vmem, size = 0x20000, scoped, tag = 'input window, operand 0']
    #allocation3 [shape = 's32[2]{0}', space=sflag, size = 0x8, scoped, tag = 'scoped memory for tpu_custom_call.1']
    #allocation4 [shape = 's32[2]{0}', space=sflag, size = 0x8, scoped, tag = 'scoped memory for tpu_custom_call.1']
    #allocation5 [shape = 'u8[16384]{0}', space=vmem, size = 0x4000, scoped, tag = 'input window, operand 1']
    #allocation6 [shape = 's32[2]{0}', space=sflag, size = 0x8, scoped, tag = 'scoped memory for tpu_custom_call.1']
    #allocation7 [shape = 'u8[131072]{0}', space=vmem, size = 0x20000, scoped, tag = 'output window, operand 0']
    %7 = vsyncpa [#allocation3], 0
    %s8 = scalar_lea.sflag [#allocation3], 1
    %9 = vsyncpa %s8, 0
    %10 = vsyncpa [#allocation6], 0
    %s11 = scalar_lea.sflag [#allocation6], 1
    %12 = vsyncpa %s11, 0
    %13 = vsyncpa [#allocation4], 0
    %s14 = scalar_lea.sflag [#allocation4], 1
    %15 = vsyncpa %s14, 0
    loop: start=0, step=1, limit=5
    $region2: #{tpu_custom_call.1} parent=1 // loop_pre_header
      _
    $region3: #{tpu_custom_call.1} parent=1 // loop_header
      %s17 = sphi 0, %s21
      %p18 = scmp.ge.s32.totalorder %s17, 5
      %s27 = sphi 0, %s29
      %s30 = sphi 0, %s27
      %s31 = sphi 0, %s30
      %s47 = sphi 0, %s31
      %s53 = sphi 0, %s55
      %s56 = sphi 0, %s53
      %s57 = sphi 0, %s56
      %s73 = sphi 0, %s57
      %s79 = sphi 0, %s81
      %s82 = sphi 0, %s79
      %s83 = sphi 0, %s82
      %s99 = sphi 0, %s83
    $region4: #{tpu_custom_call.1} parent=1 // loop_header_branch
      %20 = sbr.rel (%p18) target = $region8
    $region5: #{tpu_custom_call.1} parent=1 // loop_body
      %s22 = ssub.s32 %s17, 1
      %s23 = ssub.s32 %s17, 2
      %s24 = sadd.s32 %s17, 1
      %s25 = ssub.s32 %s17, %s24
      %p26 = scmp.eq.s32.totalorder %s25, 0
      %s28 = sadd.s32 %s27, 1
      %s29 = scalar_select %p26, %s27, %s28
      %p32 = pneg %p26
      %p33 = scmp.eq.s32.totalorder %s17, 2
      %p34 = por %p32, %p33
      %p35 = scmp.ne.s32.totalorder %s27, %s30
      %p36 = scmp.eq.s32.totalorder %s17, 0
      %p37 = por %p35, %p36
      %p38 = scmp.ne.s32.totalorder %s27, %s30
      %p39 = scmp.eq.s32.totalorder %s22, 2
      %p40 = por %p38, %p39
      %p41 = scmp.ne.s32.totalorder %s30, %s31
      %p42 = scmp.eq.s32.totalorder %s22, 0
      %p43 = por %p41, %p42
      %p44 = scmp.ne.s32.totalorder %s30, %s31
      %p45 = scmp.eq.s32.totalorder %s23, 2
      %p46 = por %p44, %p45
      %p48 = scmp.ne.s32.totalorder %s31, %s47
      %p49 = scmp.eq.s32.totalorder %s23, 0
      %p50 = por %p48, %p49
      %s51 = ssub.s32 %s17, %s24
      %p52 = scmp.eq.s32.totalorder %s51, 0
      %s54 = sadd.s32 %s53, 1
      %s55 = scalar_select %p52, %s53, %s54
      %p58 = pneg %p52
      %p59 = scmp.eq.s32.totalorder %s17, 2
      %p60 = por %p58, %p59
      %p61 = scmp.ne.s32.totalorder %s53, %s56
      %p62 = scmp.eq.s32.totalorder %s17, 0
      %p63 = por %p61, %p62
      %p64 = scmp.ne.s32.totalorder %s53, %s56
      %p65 = scmp.eq.s32.totalorder %s22, 2
      %p66 = por %p64, %p65
      %p67 = scmp.ne.s32.totalorder %s56, %s57
      %p68 = scmp.eq.s32.totalorder %s22, 0
      %p69 = por %p67, %p68
      %p70 = scmp.ne.s32.totalorder %s56, %s57
      %p71 = scmp.eq.s32.totalorder %s23, 2
      %p72 = por %p70, %p71
      %p74 = scmp.ne.s32.totalorder %s57, %s73
      %p75 = scmp.eq.s32.totalorder %s23, 0
      %p76 = por %p74, %p75
      %s77 = ssub.s32 %s17, %s24
      %p78 = scmp.eq.s32.totalorder %s77, 0
      %s80 = sadd.s32 %s79, 1
      %s81 = scalar_select %p78, %s79, %s80
      %p84 = pneg %p78
      %p85 = scmp.eq.s32.totalorder %s17, 2
      %p86 = por %p84, %p85
      %p87 = scmp.ne.s32.totalorder %s79, %s82
      %p88 = scmp.eq.s32.totalorder %s17, 0
      %p89 = por %p87, %p88
      %p90 = scmp.ne.s32.totalorder %s79, %s82
      %p91 = scmp.eq.s32.totalorder %s22, 2
      %p92 = por %p90, %p91
      %p93 = scmp.ne.s32.totalorder %s82, %s83
      %p94 = scmp.eq.s32.totalorder %s22, 0
      %p95 = por %p93, %p94
      %p96 = scmp.ne.s32.totalorder %s82, %s83
      %p97 = scmp.eq.s32.totalorder %s23, 2
      %p98 = por %p96, %p97
      %p100 = scmp.ne.s32.totalorder %s83, %s99
      %p101 = scmp.eq.s32.totalorder %s23, 0
      %p102 = por %p100, %p101
      %p103 = scmp.le.s32.totalorder 1, %s17
      %p104 = scmp.lt.s32.totalorder %s17, 4
      %p105 = pnand %p103, %p104
      %p106 = pneg %p105
      // Predicated region
      $region9: #{tpu_custom_call.1} parent=5 // pred_check
        _
      $region10: #{tpu_custom_call.1} parent=5 // pred_check_branch
        %108 = sbr.rel (%p105) target = $region12
      $region11: #{tpu_custom_call.1} parent=5 // pred_region
        %s109 = ssub.s32 %s17, 1
      $region12: #{tpu_custom_call.1} parent=5 // pred_fallthru
        _
      %p110 = scmp.lt.s32.totalorder %s17, 3
      // Predicated region
      $region13: #{tpu_custom_call.1} parent=5 // pred_check
        %p111 = pneg %p110
      $region14: #{tpu_custom_call.1} parent=5 // pred_check_branch
        %113 = sbr.rel (%p111) target = $region16
      $region15: #{tpu_custom_call.1} parent=5 // pred_region
        // Predicated region
        $region17: #{tpu_custom_call.1} parent=15 // pred_check
          %p114 = pneg %p37
        $region18: #{tpu_custom_call.1} parent=15 // pred_check_branch
          %116 = sbr.rel (%p114) target = $region20
        $region19: #{tpu_custom_call.1} parent=15 // pred_region
          %s117 = sand.u32 %s27, 1
          %s118 = scalar_lea.sflag [#allocation3], %s117
          %s119 = sand.u32 %s27, 1
          %s120 = smul.addr %s119, 128
          %s121 = scalar_lea.vmem [#allocation2], %s120
          %s122 = smul.u32 16, %s17
          %124 = vsyncadd %s118, 0
          %s125 = smul.addr %s122, 8
          %s126 = scalar_lea.hbm %s0, %s125
          %s127 = sshll.u32 %s126, 4
          %s128 = int_to_ptr.hbm [resolvable:$true] %s127
          %s129 = sshll.u32 %s121, 4
          %s130 = int_to_ptr.vmem [resolvable:$true] %s129
          %135 = dma.hbm_to_vmem [thread:$0]  %s128, 2048, %s130, %s118, 128, 128, 8
        $region20: #{tpu_custom_call.1} parent=15 // pred_fallthru
          _
        // Predicated region
        $region21: #{tpu_custom_call.1} parent=15 // pred_check
          %p136 = pneg %p63
        $region22: #{tpu_custom_call.1} parent=15 // pred_check_branch
          %138 = sbr.rel (%p136) target = $region24
        $region23: #{tpu_custom_call.1} parent=15 // pred_region
          %s139 = sand.u32 %s53, 1
          %s140 = scalar_lea.sflag [#allocation6], %s139
          %s141 = sand.u32 %s53, 1
          %s142 = smul.addr %s141, 16
          %s143 = scalar_lea.vmem [#allocation5], %s142
          %s144 = smul.u32 2, %s17
          %146 = vsyncadd %s140, 0
          %s147 = smul.addr %s144, 8
          %s148 = scalar_lea.hbm %s1, %s147
          %s149 = sshll.u32 %s148, 4
          %s150 = int_to_ptr.hbm [resolvable:$true] %s149
          %s151 = sshll.u32 %s143, 4
          %s152 = int_to_ptr.vmem [resolvable:$true] %s151
          %157 = dma.hbm_to_vmem [thread:$0]  %s150, 256, %s152, %s140, 128, 128, 8
        $region24: #{tpu_custom_call.1} parent=15 // pred_fallthru
          _
      $region16: #{tpu_custom_call.1} parent=5 // pred_fallthru
        _
      %p158 = scmp.le.s32.totalorder 1, %s17
      %p159 = scmp.lt.s32.totalorder %s17, 4
      %p160 = pnand %p158, %p159
      %p161 = pneg %p160
      // Predicated region
      $region25: #{tpu_custom_call.1} parent=5 // pred_check
        _
      $region26: #{tpu_custom_call.1} parent=5 // pred_check_branch
        %163 = sbr.rel (%p160) target = $region28
      $region27: #{tpu_custom_call.1} parent=5 // pred_region
        %s164 = ssub.s32 %s17, 1
        %s165 = sand.u32 %s30, 1
        %s166 = scalar_lea.sflag [#allocation3], %s165
        %s167 = sand.u32 %s30, 1
        %s168 = smul.addr %s167, 128
        %s169 = scalar_lea.vmem [#allocation2], %s168
        // Predicated region
        $region29: #{tpu_custom_call.1} parent=27 // pred_check
          %p170 = pneg %p43
        $region30: #{tpu_custom_call.1} parent=27 // pred_check_branch
          %172 = sbr.rel (%p170) target = $region32
        $region31: #{tpu_custom_call.1} parent=27 // pred_region
          %174 = dma.done %s166, 2048
        $region32: #{tpu_custom_call.1} parent=27 // pred_fallthru
          _
        %s175 = sand.u32 %s56, 1
        %s176 = scalar_lea.sflag [#allocation6], %s175
        %s177 = sand.u32 %s56, 1
        %s178 = smul.addr %s177, 16
        %s179 = scalar_lea.vmem [#allocation5], %s178
        // Predicated region
        $region33: #{tpu_custom_call.1} parent=27 // pred_check
          %p180 = pneg %p69
        $region34: #{tpu_custom_call.1} parent=27 // pred_check_branch
          %182 = sbr.rel (%p180) target = $region36
        $region35: #{tpu_custom_call.1} parent=27 // pred_region
          %184 = dma.done %s176, 256
        $region36: #{tpu_custom_call.1} parent=27 // pred_fallthru
          _
        %s185 = sand.u32 %s30, 1
        %s186 = scalar_lea.sflag [#allocation3], %s185
        %s187 = sand.u32 %s30, 1
        %s188 = smul.addr %s187, 128
        %s189 = scalar_lea.vmem [#allocation2], %s188
        %p190 = pneg %p43
        %p191 = pneg %p40
        %s192 = sand.u32 %s56, 1
        %s193 = scalar_lea.sflag [#allocation6], %s192
        %s194 = sand.u32 %s56, 1
        %s195 = smul.addr %s194, 16
        %s196 = scalar_lea.vmem [#allocation5], %s195
        %p197 = pneg %p69
        %p198 = pneg %p66
        %p199 = pneg %p95
        %p200 = pneg %p92
        %s201 = sand.u32 %s82, 1
        %s202 = scalar_lea.sflag [#allocation4], %s201
        %s203 = sand.u32 %s82, 1
        %s204 = smul.addr %s203, 128
        %s205 = scalar_lea.vmem [#allocation7], %s204
        %s206 = smul.u32 16, %s22
        %s207 = smul.u32 2, %s22
        %s208 = smul.u32 16, %s22
        %v209 = vld [vmem:[%s169] sm:$0xff]
        %v210 = vld [vmem:[%s169 + $0x8] sm:$0xff]
        %v211 = vld [vmem:[%s169 + $0x10] sm:$0xff]
        %v212 = vld [vmem:[%s169 + $0x18] sm:$0xff]
        %v213 = vld [vmem:[%s169 + $0x20] sm:$0xff]
        %v214 = vld [vmem:[%s169 + $0x28] sm:$0xff]
        %v215 = vld [vmem:[%s169 + $0x30] sm:$0xff]
        %v216 = vld [vmem:[%s169 + $0x38] sm:$0xff]
        %v217 = vld [vmem:[%s169 + $0x40] sm:$0xff]
        %v218 = vld [vmem:[%s169 + $0x48] sm:$0xff]
        %v219 = vld [vmem:[%s169 + $0x50] sm:$0xff]
        %v220 = vld [vmem:[%s169 + $0x58] sm:$0xff]
        %v221 = vld [vmem:[%s169 + $0x60] sm:$0xff]
        %v222 = vld [vmem:[%s169 + $0x68] sm:$0xff]
        %v223 = vld [vmem:[%s169 + $0x70] sm:$0xff]
        %v224 = vld [vmem:[%s169 + $0x78] sm:$0xff]
        %v225 = vld [vmem:[%s179] sm:$0xff]
        %v226 = vld [vmem:[%s179 + $0x8] sm:$0xff]
        %v229 = vrot.slane %v225, 1
        %v230 = vrot.slane %v225, 2
        %v231 = vrot.slane %v225, 3
        %v232 = vrot.slane %v225, 4
        %v233 = vrot.slane %v225, 5
        %v234 = vrot.slane %v225, 6
        %v235 = vrot.slane %v225, 7
        %v236 = vrot.slane %v226, 1
        %v237 = vrot.slane %v226, 2
        %v238 = vrot.slane %v226, 3
        %v239 = vrot.slane %v226, 4
        %v240 = vrot.slane %v226, 5
        %v241 = vrot.slane %v226, 6
        %v242 = vrot.slane %v226, 7
        %v243 = vperm.slane %v225, 0
        %v244 = vperm.slane %v229, 0
        %v245 = vperm.slane %v230, 0
        %v246 = vperm.slane %v231, 0
        %v247 = vperm.slane %v232, 0
        %v248 = vperm.slane %v233, 0
        %v249 = vperm.slane %v234, 0
        %v250 = vperm.slane %v235, 0
        %v251 = vperm.slane %v226, 0
        %v252 = vperm.slane %v236, 0
        %v253 = vperm.slane %v237, 0
        %v254 = vperm.slane %v238, 0
        %v255 = vperm.slane %v239, 0
        %v256 = vperm.slane %v240, 0
        %v257 = vperm.slane %v241, 0
        %v258 = vperm.slane %v242, 0
        %v275 = vadd.f32 %v209, %v243
        %v276 = vadd.f32 %v210, %v244
        %v277 = vadd.f32 %v211, %v245
        %v278 = vadd.f32 %v212, %v246
        %v279 = vadd.f32 %v213, %v247
        %v280 = vadd.f32 %v214, %v248
        %v281 = vadd.f32 %v215, %v249
        %v282 = vadd.f32 %v216, %v250
        %v283 = vadd.f32 %v217, %v251
        %v284 = vadd.f32 %v218, %v252
        %v285 = vadd.f32 %v219, %v253
        %v286 = vadd.f32 %v220, %v254
        %v287 = vadd.f32 %v221, %v255
        %v288 = vadd.f32 %v222, %v256
        %v289 = vadd.f32 %v223, %v257
        %v290 = vadd.f32 %v224, %v258
        %291 = vst [vmem:[%s205] sm:$0xff] %v275
        %292 = vst [vmem:[%s205 + $0x8] sm:$0xff] %v276
        %293 = vst [vmem:[%s205 + $0x10] sm:$0xff] %v277
        %294 = vst [vmem:[%s205 + $0x18] sm:$0xff] %v278
        %295 = vst [vmem:[%s205 + $0x20] sm:$0xff] %v279
        %296 = vst [vmem:[%s205 + $0x28] sm:$0xff] %v280
        %297 = vst [vmem:[%s205 + $0x30] sm:$0xff] %v281
        %298 = vst [vmem:[%s205 + $0x38] sm:$0xff] %v282
        %299 = vst [vmem:[%s205 + $0x40] sm:$0xff] %v283
        %300 = vst [vmem:[%s205 + $0x48] sm:$0xff] %v284
        %301 = vst [vmem:[%s205 + $0x50] sm:$0xff] %v285
        %302 = vst [vmem:[%s205 + $0x58] sm:$0xff] %v286
        %303 = vst [vmem:[%s205 + $0x60] sm:$0xff] %v287
        %304 = vst [vmem:[%s205 + $0x68] sm:$0xff] %v288
        %305 = vst [vmem:[%s205 + $0x70] sm:$0xff] %v289
        %306 = vst [vmem:[%s205 + $0x78] sm:$0xff] %v290
        %s307 = sand.u32 %s82, 1
        %s308 = scalar_lea.sflag [#allocation4], %s307
        %s309 = sand.u32 %s82, 1
        %s310 = smul.addr %s309, 128
        %s311 = scalar_lea.vmem [#allocation7], %s310
        // Predicated region
        $region37: #{tpu_custom_call.1} parent=27 // pred_check
          %p312 = pneg %p92
        $region38: #{tpu_custom_call.1} parent=27 // pred_check_branch
          %314 = sbr.rel (%p312) target = $region40
        $region39: #{tpu_custom_call.1} parent=27 // pred_region
          %s315 = smul.u32 16, %s22
          %317 = vsyncadd %s308, 0
          %s318 = smul.addr %s315, 8
          %s319 = scalar_lea.hbm %s2, %s318
          %s320 = sshll.u32 %s311, 4
          %s321 = int_to_ptr.vmem [resolvable:$true] %s320
          %s322 = sshll.u32 %s319, 4
          %s323 = int_to_ptr.hbm [resolvable:$true] %s322
          %328 = dma.vmem_to_hbm [thread:$0]  %s321, 2048, %s323, %s308, 128, 128, 8
        $region40: #{tpu_custom_call.1} parent=27 // pred_fallthru
          _
      $region28: #{tpu_custom_call.1} parent=5 // pred_fallthru
        _
      %p329 = scmp.le.s32.totalorder 2, %s17
      // Predicated region
      $region41: #{tpu_custom_call.1} parent=5 // pred_check
        %p330 = pneg %p329
      $region42: #{tpu_custom_call.1} parent=5 // pred_check_branch
        %332 = sbr.rel (%p330) target = $region44
      $region43: #{tpu_custom_call.1} parent=5 // pred_region
        %s333 = ssub.s32 %s17, 2
        // Predicated region
        $region45: #{tpu_custom_call.1} parent=43 // pred_check
          %p334 = pneg %p98
        $region46: #{tpu_custom_call.1} parent=43 // pred_check_branch
          %336 = sbr.rel (%p334) target = $region48
        $region47: #{tpu_custom_call.1} parent=43 // pred_region
          %s337 = sand.u32 %s83, 1
          %s338 = scalar_lea.sflag [#allocation4], %s337
          %s339 = sand.u32 %s83, 1
          %s340 = smul.addr %s339, 128
          %s341 = scalar_lea.vmem [#allocation7], %s340
          %343 = dma.done %s338, 2048
        $region48: #{tpu_custom_call.1} parent=43 // pred_fallthru
          _
      $region44: #{tpu_custom_call.1} parent=5 // pred_fallthru
        _
    $region6: #{tpu_custom_call.1} parent=1 // loop_footer
      %s21 = sadd.s32 1, %s17
    $region7: #{tpu_custom_call.1} parent=1 // loop_footer_branch
      %16 = sbr.rel target = $region3
    $region8: #{tpu_custom_call.1} parent=1 // loop_exit
      _
    %344 = vsyncpa [#allocation3], 1
    %s345 = scalar_lea.sflag [#allocation3], 1
    %346 = vsyncpa %s345, 1
    %347 = vsyncpa [#allocation6], 1
    %s348 = scalar_lea.sflag [#allocation6], 1
    %349 = vsyncpa %s348, 1
    %350 = vsyncpa [#allocation4], 1
    %s351 = scalar_lea.sflag [#allocation4], 1
    %352 = vsyncpa %s351, 1

</llo_original>
